<compile_context>
chip_gen: v7x
topology: tpu7x:2x2x1
jax: 0.10.0
libtpu: 0.0.40
codegen_flags: <defaults>
</compile_context>

<pallas_src>
import functools

import jax
import jax.numpy as jnp
from jax.experimental import pallas as pl
from jax.experimental.pallas import tpu as pltpu


# ---------------------------------------------------------------------------
# Kernel bodies
# ---------------------------------------------------------------------------

def _ce_ls_cols_kernel(logits_t_ref, labels_ref, out_ref, *,
                       epsilon: float, num_classes: int):
    """Small-K path. Blocks: logits (K, TB) [batch on lanes], labels (1, TB),
    out (1, TB). All reductions run over the sublane (class) axis."""
    x = logits_t_ref[...]                                   # (K, TB) native dtype
    labels = labels_ref[...]                                # (1, TB) int32

    m = jnp.max(x, axis=0, keepdims=True)                   # native-dtype max
    z = x.astype(jnp.float32) - m.astype(jnp.float32)       # cast fused into sub
    lse = jnp.log(jnp.sum(jnp.exp(z), axis=0, keepdims=True))   # (1, TB)

    # Fused smoothed-CE weights (they sum to 1, so the max shift cancels):
    #   per = lse - sum_k (eps/K + (1-eps)*1{k==label}) * z_k
    row = jax.lax.broadcasted_iota(jnp.int32, z.shape, dimension=0)
    w = (epsilon / num_classes
         + (1.0 - epsilon) * (row == labels).astype(jnp.float32))
    ws = jnp.sum(w * z, axis=0, keepdims=True)              # (1, TB)

    out_ref[...] = lse - ws                                 # lane-dense store


def _ce_ls_rows_kernel(logits_ref, labels_ref, out_ref, *,
                       epsilon: float, num_classes: int):
    """Medium-K single-pass path. Blocks: logits (TB, K), labels (TB, 1),
    out (1, TB)."""
    x = logits_ref[...]                                     # (TB, K)
    labels = labels_ref[...]                                # (TB, 1) int32

    m = jnp.max(x, axis=1, keepdims=True)
    z = x.astype(jnp.float32) - m.astype(jnp.float32)       # (TB, K)
    lse = jnp.log(jnp.sum(jnp.exp(z), axis=1, keepdims=True))

    col = jax.lax.broadcasted_iota(jnp.int32, z.shape, dimension=1)
    w = (epsilon / num_classes
         + (1.0 - epsilon) * (col == labels).astype(jnp.float32))
    ws = jnp.sum(w * z, axis=1, keepdims=True)              # (TB, 1)

    per = lse - ws                                          # (TB, 1)
    out_ref[...] = per.reshape(1, -1)                       # lane-dense (1, TB)


def _ce_ls_ktiled_kernel(logits_ref, labels_ref, out_ref,
                         m_sc, l_sc, ws_sc, *,
                         epsilon: float, num_classes: int, block_k: int):
    """Large-K online-LSE path. Grid = (batch tiles, K tiles), K innermost.
    Running max / exp-sum / weighted-sum live in VMEM scratch."""
    k = pl.program_id(1)
    nk = pl.num_programs(1)

    @pl.when(k == 0)
    def _():
        m_sc[...] = jnp.full_like(m_sc, -jnp.inf)
        l_sc[...] = jnp.zeros_like(l_sc)
        ws_sc[...] = jnp.zeros_like(ws_sc)

    x = logits_ref[...].astype(jnp.float32)                 # (TB, TK)
    labels = labels_ref[...]                                # (TB, 1) int32
    col = block_k * k + jax.lax.broadcasted_iota(jnp.int32, x.shape, 1)

    if num_classes % block_k != 0:                          # static: tail K tile partial
        valid = col < num_classes
        x_max = jnp.where(valid, x, -jnp.inf)               # garbage out of max / exp
        x_ws = jnp.where(valid, x, 0.0)                     # garbage out of weighted sum
    else:
        x_max = x
        x_ws = x

    # Weighted sum over the *unshifted* logits (weights sum to 1, so the max
    # shift cancels at the end) — no rescaling needed while streaming K tiles.
    w = (epsilon / num_classes
         + (1.0 - epsilon) * (col == labels).astype(jnp.float32))
    ws_sc[...] += jnp.sum(w * x_ws, axis=1, keepdims=True)

    m_prev = m_sc[...]
    m_new = jnp.maximum(m_prev, jnp.max(x_max, axis=1, keepdims=True))
    l_sc[...] = (l_sc[...] * jnp.exp(m_prev - m_new)
                 + jnp.sum(jnp.exp(x_max - m_new), axis=1, keepdims=True))
    m_sc[...] = m_new

    @pl.when(k == nk - 1)
    def _():
        # per = logsumexp(x) - sum_k w_k * x_k
        per = m_sc[...] + jnp.log(l_sc[...]) - ws_sc[...]   # (TB, 1)
        out_ref[...] = per.reshape(1, -1)                   # lane-dense (1, TB)


# ---------------------------------------------------------------------------
# Wrapper
# ---------------------------------------------------------------------------

def _vmem_capacity_bytes() -> int:
    """Physical VMEM of the attached TPU; conservative fallback (v7x 64 MiB)."""
    try:
        cap = int(getattr(pltpu.get_tpu_info(), "vmem_capacity_bytes", 0))
        if cap > 0:
            return cap
    except Exception:
        pass
    return 64 * 1024 * 1024


def _round_down(x: int, m: int) -> int:
    return (x // m) * m


def cross_entropy_label_smooth(logits, labels, *, num_classes,
                               epsilon=0.1, reduction=True, block_k=None):
    """Pallas equivalent of CrossEntropyLabelSmooth.forward.

    logits:  (B, K) float array (pre-softmax scores), f32 or bf16.
    labels:  (B,)   int array of class indices in [0, K).
    block_k: optional K-tile override; forces the online-LSE K-tiled path.
    """
    B, K = logits.shape
    assert K == num_classes
    labels = labels.astype(jnp.int32)
    eps = float(epsilon)
    ncls = int(num_classes)

    vmem_cap = _vmem_capacity_bytes()
    # ~6.4 MiB logits-tile budget on v7x (64 MiB VMEM), ~12.8 MiB on v5e/v6e.
    budget_elems = max(vmem_cap // 10, 2 * 1024 * 1024) // 4
    vmem_limit = (vmem_cap * 3) // 4

    cost = pl.CostEstimate(
        flops=6 * B * K,
        transcendentals=B * K,
        bytes_accessed=B * K * logits.dtype.itemsize + 8 * B)

    if block_k is None and K < 128:
        # --- small-K path: batch on the lane axis (full lane utilisation) ---
        tb = min(1024, _round_down(B, 128)) if B >= 128 else B
        nb = pl.cdiv(B, tb)
        out = pl.pallas_call(
            functools.partial(_ce_ls_cols_kernel, epsilon=eps, num_classes=ncls),
            out_shape=jax.ShapeDtypeStruct((1, nb * tb), jnp.float32),
            grid=(nb,),
            in_specs=[pl.BlockSpec((K, tb), lambda i: (0, i)),
                      pl.BlockSpec((1, tb), lambda i: (0, i))],
            out_specs=pl.BlockSpec((1, tb), lambda i: (0, i)),
            compiler_params=pltpu.CompilerParams(
                dimension_semantics=("parallel",),
                vmem_limit_bytes=vmem_limit),
            cost_estimate=cost,
        )(logits.T, labels.reshape(1, B))
        per_sample = out[0, :B]

    elif block_k is None and budget_elems // K >= 256:
        # --- medium-K path: full class row per tile, single pass ---
        tb = _round_down(min(budget_elems // K, 512), 128)
        if B <= tb:
            tb = B                                   # single full-extent block
        nb = pl.cdiv(B, tb)
        out = pl.pallas_call(
            functools.partial(_ce_ls_rows_kernel, epsilon=eps, num_classes=ncls),
            out_shape=jax.ShapeDtypeStruct((1, nb * tb), jnp.float32),
            grid=(nb,),
            in_specs=[pl.BlockSpec((tb, K), lambda i: (i, 0)),
                      pl.BlockSpec((tb, 1), lambda i: (i, 0))],
            out_specs=pl.BlockSpec((1, tb), lambda i: (0, i)),
            compiler_params=pltpu.CompilerParams(
                dimension_semantics=("parallel",),
                vmem_limit_bytes=vmem_limit),
            cost_estimate=cost,
        )(logits, labels.reshape(B, 1))
        per_sample = out[0, :B]

    else:
        # --- large-K path: online log-sum-exp over K tiles ---
        tb = 256 if B > 256 else B
        nb = pl.cdiv(B, tb)
        if block_k is not None:
            tk = min(int(block_k), K)
            if tk < K:
                assert tk % 128 == 0, "block_k must be a multiple of 128"
        else:
            tk = max(128, _round_down(budget_elems // max(tb, 1), 128))
            tk = min(tk, _round_down(K, 128))
        nk = pl.cdiv(K, tk)
        out = pl.pallas_call(
            functools.partial(_ce_ls_ktiled_kernel, epsilon=eps,
                              num_classes=ncls, block_k=tk),
            out_shape=jax.ShapeDtypeStruct((1, nb * tb), jnp.float32),
            grid=(nb, nk),
            in_specs=[pl.BlockSpec((tb, tk), lambda i, k: (i, k)),
                      pl.BlockSpec((tb, 1), lambda i, k: (i, 0))],
            out_specs=pl.BlockSpec((1, tb), lambda i, k: (0, i)),
            scratch_shapes=[pltpu.VMEM((tb, 1), jnp.float32)] * 3,
            compiler_params=pltpu.CompilerParams(
                dimension_semantics=("parallel", "arbitrary"),
                vmem_limit_bytes=vmem_limit),
            cost_estimate=cost,
        )(logits, labels.reshape(B, 1))
        per_sample = out[0, :B]

    if reduction:
        return jnp.mean(per_sample)
    return per_sample


# ---------------------------------------------------------------------------
# Self-test
# ---------------------------------------------------------------------------

if __name__ == "__main__":
    key = jax.random.PRNGKey(0)
    eps = 0.1

    def ref_fn(x, y, num_classes, epsilon, reduction=True):
        lp = jax.nn.log_softmax(x.astype(jnp.float32), axis=1)
        oh = jax.nn.one_hot(y, num_classes, dtype=jnp.float32)
        sm = (1.0 - epsilon) * oh + epsilon / num_classes
        per = jnp.sum(-sm * lp, axis=1)
        return jnp.mean(per) if reduction else per

    # 1) Small-K path (K < 128): batch=8, classes=16, f32; mean + per-sample.
    B, K = 8, 16
    k1, k2, key = jax.random.split(key, 3)
    logits = jax.random.normal(k1, (B, K), dtype=jnp.float32)
    labels = jax.random.randint(k2, (B,), 0, K, dtype=jnp.int32)
    loss = jax.block_until_ready(
        cross_entropy_label_smooth(logits, labels, num_classes=K, epsilon=eps))
    assert jnp.allclose(loss, ref_fn(logits, labels, K, eps),
                        atol=1e-5, rtol=1e-5), (loss, ref_fn(logits, labels, K, eps))
    per = jax.block_until_ready(
        cross_entropy_label_smooth(logits, labels, num_classes=K, epsilon=eps,
                                   reduction=False))
    assert per.shape == (B,)
    assert jnp.allclose(per, ref_fn(logits, labels, K, eps, reduction=False),
                        atol=1e-5, rtol=1e-5)

    # 2) Small-K path, bf16 logits, batch not tile-aligned (partial lane block).
    B2, K2 = 200, 16
    k1, k2, key = jax.random.split(key, 3)
    logits2 = jax.random.normal(k1, (B2, K2), jnp.float32).astype(jnp.bfloat16)
    labels2 = jax.random.randint(k2, (B2,), 0, K2, dtype=jnp.int32)
    per2 = jax.block_until_ready(
        cross_entropy_label_smooth(logits2, labels2, num_classes=K2,
                                   epsilon=eps, reduction=False))
    ref2 = ref_fn(logits2, labels2, K2, eps, reduction=False)
    assert per2.shape == (B2,)
    assert jnp.allclose(per2, ref2, atol=1e-4, rtol=1e-4)

    # 3) Medium-K single-pass row path with a partial tail batch block.
    B3, K3 = 600, 192
    k1, k2, key = jax.random.split(key, 3)
    logits3 = jax.random.normal(k1, (B3, K3), dtype=jnp.float32)
    labels3 = jax.random.randint(k2, (B3,), 0, K3, dtype=jnp.int32)
    per3 = jax.block_until_ready(
        cross_entropy_label_smooth(logits3, labels3, num_classes=K3,
                                   epsilon=eps, reduction=False))
    ref3 = ref_fn(logits3, labels3, K3, eps, reduction=False)
    assert jnp.allclose(per3, ref3, atol=1e-5, rtol=1e-5)

    # 4) Forced online-LSE K-tiled path: divisible K and masked tail K tile.
    for (B4, K4) in ((40, 384), (40, 320)):
        k1, k2, key = jax.random.split(key, 3)
        logits4 = jax.random.normal(k1, (B4, K4), dtype=jnp.float32)
        labels4 = jax.random.randint(k2, (B4,), 0, K4, dtype=jnp.int32)
        per4 = jax.block_until_ready(
            cross_entropy_label_smooth(logits4, labels4, num_classes=K4,
                                       epsilon=eps, reduction=False,
                                       block_k=128))
        ref4 = ref_fn(logits4, labels4, K4, eps, reduction=False)
        assert jnp.allclose(per4, ref4, atol=2e-5, rtol=1e-5), (per4, ref4)

    print("KERNEL_OK")
</pallas_src>

<mosaic_0001>
module attributes {stable_mosaic.version = 11 : i64} {
  func.func @_ce_ls_cols_kernel(%arg0: i32, %arg1: memref<16x8xf32, #tpu.memory_space<vmem>>, %arg2: memref<1x8xi32, #tpu.memory_space<vmem>>, %arg3: memref<1x8xf32, #tpu.memory_space<vmem>>) attributes {dimension_semantics = [#tpu.dimension_semantics<parallel>], iteration_bounds = array<i64: 1>, scalar_prefetch = 0 : i64, scratch_operands = 0 : i64, tpu.core_type = #tpu.core_type<tc>, window_params = [{transform_indices = @transform_0, window_bounds = array<i64: 16, 8>}, {transform_indices = @transform_1, window_bounds = array<i64: 1, 8>}, {transform_indices = @transform_2, window_bounds = array<i64: 1, 8>}]} {
    %c0 = arith.constant 0 : index
    %c0_0 = arith.constant 0 : index
    %0 = vector.load %arg1[%c0, %c0_0] : memref<16x8xf32, #tpu.memory_space<vmem>>, vector<16x8xf32>
    %c0_1 = arith.constant 0 : index
    %c0_2 = arith.constant 0 : index
    %1 = vector.load %arg2[%c0_1, %c0_2] : memref<1x8xi32, #tpu.memory_space<vmem>>, vector<1x8xi32>
    %cst = arith.constant dense<0xFF800000> : vector<8xf32>
    %2 = vector.multi_reduction <maximumf>, %0, %cst [0] : vector<16x8xf32> to vector<8xf32>
    %3 = vector.shape_cast %2 : vector<8xf32> to vector<1x8xf32>
    %4 = vector.broadcast %3 : vector<1x8xf32> to vector<16x8xf32>
    %5 = arith.subf %0, %4 : vector<16x8xf32>
    %6 = math.exp %5 : vector<16x8xf32>
    %cst_3 = arith.constant dense<0.000000e+00> : vector<8xf32>
    %7 = vector.multi_reduction <add>, %6, %cst_3 [0] : vector<16x8xf32> to vector<8xf32>
    %8 = vector.shape_cast %7 : vector<8xf32> to vector<1x8xf32>
    %9 = math.log %8 : vector<1x8xf32>
    %10 = tpu.iota {dimensions = array<i32: 0>} : vector<16x8xi32>
    %11 = vector.broadcast %1 : vector<1x8xi32> to vector<16x8xi32>
    %12 = arith.cmpi eq, %10, %11 : vector<16x8xi32>
    %13 = arith.extui %12 : vector<16x8xi1> to vector<16x8xi32>
    %14 = arith.sitofp %13 : vector<16x8xi32> to vector<16x8xf32>
    %cst_4 = arith.constant 0.899999976 : f32
    %15 = vector.broadcast %cst_4 : f32 to vector<16x8xf32>
    %16 = arith.mulf %15, %14 : vector<16x8xf32>
    %cst_5 = arith.constant 6.250000e-03 : f32
    %17 = vector.broadcast %cst_5 : f32 to vector<16x8xf32>
    %18 = arith.addf %17, %16 : vector<16x8xf32>
    %19 = arith.mulf %18, %5 : vector<16x8xf32>
    %cst_6 = arith.constant dense<0.000000e+00> : vector<8xf32>
    %20 = vector.multi_reduction <add>, %19, %cst_6 [0] : vector<16x8xf32> to vector<8xf32>
    %21 = vector.shape_cast %20 : vector<8xf32> to vector<1x8xf32>
    %22 = arith.subf %9, %21 : vector<1x8xf32>
    %c0_7 = arith.constant 0 : index
    %c0_8 = arith.constant 0 : index
    %23 = vector.load %arg3[%c0_7, %c0_8] : memref<1x8xf32, #tpu.memory_space<vmem>>, vector<1x8xf32>
    tpu.vector_store %arg3[%c0_7, %c0_8], %22 {strides = array<i32>} : memref<1x8xf32, #tpu.memory_space<vmem>>, vector<1x8xf32>,
    return
  }
  func.func @transform_0(%arg0: i32) -> (i32, i32) {
    %c0_i32 = arith.constant 0 : i32
    %c0_i32_0 = arith.constant 0 : i32
    return %c0_i32, %arg0 : i32, i32
  }
  func.func @transform_1(%arg0: i32) -> (i32, i32) {
    %c0_i32 = arith.constant 0 : i32
    %c0_i32_0 = arith.constant 0 : i32
    return %c0_i32, %arg0 : i32, i32
  }
  func.func @transform_2(%arg0: i32) -> (i32, i32) {
    %c0_i32 = arith.constant 0 : i32
    %c0_i32_0 = arith.constant 0 : i32
    return %c0_i32, %arg0 : i32, i32
  }
}

</mosaic_0001>

<llo_original>
// kernel: tpu_custom_call.1
$region0: #{tpu_custom_call.1}
  #allocation0 [shape = 'u32[]', space=smem, size = 0x4, offset = 0x4, fixed_abs, tag = 'smem constant byte address 0x4 - core index']
  #allocation1 [shape = 'u32[144,128]{1,0:T(1,128)}', space=vmem, size = 0x12000, scoped, tag = 'internal scratch']
  %s0 = inlined_call_operand.vmem [shape: f32[16,8], index: 0, kind: input, shape index: {}]
  %s1 = inlined_call_operand.vmem [shape: s32[1,8], index: 1, kind: input, shape index: {}]
  %s2 = inlined_call_operand.hbm [shape: f32[1,8], index: 2, kind: output, shape index: {}]
  %s3 = sld [smem:[#allocation0]]
  $region18: #{tpu_custom_call.1} parent=0
    _
  %s5 = ssub.s32 1, %s3
  %s6 = scalar_select 0, %s5, %s3
  $region1: #{tpu_custom_call.1} parent=0
    #allocation2 [shape = 'u8[512]{0}', space=vmem, size = 0x400, scoped, tag = 'output window, operand 0, single buffered']
    #allocation3 [shape = 's32[1]{0}', space=sflag, size = 0x4, scoped, tag = 'scoped memory for tpu_custom_call.1']
    %7 = vsyncpa [#allocation3], 0
    // Predicated region
    $region2: #{tpu_custom_call.1} parent=1 // pred_check
      _
    $region3: #{tpu_custom_call.1} parent=1 // pred_check_branch
      %9 = sbr.rel (0) target = $region5
    $region4: #{tpu_custom_call.1} parent=1 // pred_region
      _
    $region5: #{tpu_custom_call.1} parent=1 // pred_fallthru
      _
    // Predicated region
    $region6: #{tpu_custom_call.1} parent=1 // pred_check
      _
    $region7: #{tpu_custom_call.1} parent=1 // pred_check_branch
      %11 = sbr.rel (0) target = $region9
    $region8: #{tpu_custom_call.1} parent=1 // pred_region
      _
    $region9: #{tpu_custom_call.1} parent=1 // pred_fallthru
      _
    %v12 = vld [vmem:[%s0] sm:$0xff]
    %v13 = vld [vmem:[%s0 + $0x8] sm:$0xff]
    %v14 = vld [vmem:[%s1] sm:$0x1]
    %vm15 = vcmask 64512
    %v16 = vsel %vm15, %v12, -inf
    %v17 = vsel %vm15, %v13, -inf
    %v18 = vmax.f32 %v16, %v17
    %v19 = vrot.slane %v18, 4
    %v20 = vmax.f32 %v18, %v19
    %v21 = vrot.slane %v20, 2
    %v22 = vmax.f32 %v20, %v21
    %v23 = vrot.slane %v22, 1
    %v24 = vmax.f32 %v22, %v23
    %v25 = vsub.f32 %v12, %v24
    %v26 = vsub.f32 %v13, %v24
    %v27 = vmul.f32 %v25, 1.442695
    %v28 = vpow.pop %v27
    %v29 = vmul.f32 %v26, 1.442695
    %v30 = vpow.pop %v29
    %v31 = vsel %vm15, %v28, 0.0
    %v32 = vsel %vm15, %v30, 0.0
    %v33 = vadd.f32 %v31, %v32
    %v34 = vrot.slane %v33, 4
    %v35 = vadd.f32 %v33, %v34
    %v36 = vrot.slane %v35, 2
    %v37 = vadd.f32 %v35, %v36
    %v38 = vrot.slane %v37, 1
    %v39 = vadd.f32 %v37, %v38
    %v40 = vlog2.pop %v39
    %v41 = vmul.f32 %v40, 0.6931472
    %v42 = vlaneseq
    %v43 = vshrl.u32 %v42, 7
    %v44 = vadd.s32 %v43, 8
    %v45 = vlaneseq
    %v46 = vshrl.u32 %v45, 7
    %v47 = vsub.s32 0, %v46
    %v48 = vrot.slane %v14, %v47
    %vm49 = vcmp.eq.s32.totalorder %v43, %v48
    %vm50 = vcmp.eq.s32.totalorder %v44, %v48
    %v51 = vsel %vm49, 1, 0
    %v52 = vsel %vm50, 1, 0
    %v53 = vcvt.s32.f32 %v51
    %v54 = vcvt.s32.f32 %v52
    %v55 = vmul.f32 %v53, 0.9
    %v56 = vmul.f32 %v54, 0.9
    %v57 = vadd.f32 %v55, 0.00625
    %v58 = vadd.f32 %v56, 0.00625
    %v59 = vmul.f32 %v57, %v25
    %v60 = vmul.f32 %v58, %v26
    %v61 = vsel %vm15, %v59, 0.0
    %v62 = vsel %vm15, %v60, 0.0
    %v63 = vadd.f32 %v61, %v62
    %v64 = vrot.slane %v63, 4
    %v65 = vadd.f32 %v63, %v64
    %v66 = vrot.slane %v65, 2
    %v67 = vadd.f32 %v65, %v66
    %v68 = vrot.slane %v67, 1
    %v69 = vadd.f32 %v67, %v68
    %v70 = vsub.f32 %v41, %v69
    %vm71 = vcmask 57344
    %72 = vst.msk [vmem:[#allocation2] sm:$0x1] %vm71, %v70
    // Predicated region
    $region10: #{tpu_custom_call.1} parent=1 // pred_check
      _
    $region11: #{tpu_custom_call.1} parent=1 // pred_check_branch
      %74 = sbr.rel (0) target = $region13
    $region12: #{tpu_custom_call.1} parent=1 // pred_region
      %s76 = ssub.s32 16, 16
      %77 = vsyncadd [#allocation3], %s76
      %s79 = sshll.u32 [#allocation2], 4
      %s80 = int_to_ptr.vmem [resolvable:$true] %s79
      %82 = dma.vmem_to_hbm [thread:$0]  %s80, 16, %s2, [#allocation3]
    $region13: #{tpu_custom_call.1} parent=1 // pred_fallthru
      _
    // Predicated region
    $region14: #{tpu_custom_call.1} parent=1 // pred_check
      _
    $region15: #{tpu_custom_call.1} parent=1 // pred_check_branch
      %84 = sbr.rel (0) target = $region17
    $region16: #{tpu_custom_call.1} parent=1 // pred_region
      %85 = dma.done [#allocation3], 16
    $region17: #{tpu_custom_call.1} parent=1 // pred_fallthru
      _
    %86 = vsyncpa [#allocation3], 1

</llo_original>
